<compile_context>
chip_gen: v6e
topology: v6e:2x2x1
jax: 0.10.0
libtpu: 0.0.40
codegen_flags: <defaults>
</compile_context>

<pallas_src>
import functools

import jax
import jax.numpy as jnp
from jax.experimental import pallas as pl
from jax.experimental.pallas import tpu as pltpu


def _bn_kernel(x_ref, gamma_ref, beta_ref, o_ref, *, eps, inv_l):
    # x_ref: (N, C, HW) — C on sublanes, HW on lanes.  gamma/beta: (1, C, 1).
    x = x_ref[...].astype(jnp.float32)

    # Per-channel batch statistics (biased variance): reduce over N and HW.
    mean = jnp.sum(x, axis=(0, 2), keepdims=True) * inv_l                 # (1, C, 1)
    centered = x - mean
    var = jnp.sum(centered * centered, axis=(0, 2), keepdims=True) * inv_l

    # Fold affine into per-channel scale/shift (rsqrt on the EUP slot).
    scale = jax.lax.rsqrt(var + eps) * gamma_ref[...]                     # (1, C, 1)
    shift = beta_ref[...] - mean * scale                                  # (1, C, 1)

    # y = x*scale + shift: `centered` is dead after the variance reduction.
    o_ref[...] = (x * scale + shift).astype(o_ref.dtype)


def batchnorm2d(x_nchw, gamma, beta, eps=1e-5):
    """BatchNorm2d forward (training-mode batch stats), x in NCHW."""
    n, c, h, w = x_nchw.shape
    l = n * h * w

    # Free reshapes only — no data movement, no extra XLA ops.
    x3 = x_nchw.reshape(n, c, h * w)
    gamma3 = gamma.reshape(1, c, 1).astype(jnp.float32)
    beta3 = beta.reshape(1, c, 1).astype(jnp.float32)

    kernel = functools.partial(_bn_kernel, eps=float(eps), inv_l=1.0 / float(l))

    vmem = pl.BlockSpec(memory_space=pltpu.MemorySpace.VMEM)  # full-array block in VMEM
    y3 = pl.pallas_call(
        kernel,
        out_shape=jax.ShapeDtypeStruct((n, c, h * w), x_nchw.dtype),
        in_specs=[vmem, vmem, vmem],
        out_specs=vmem,
    )(x3, gamma3, beta3)

    return y3.reshape(n, c, h, w)


if __name__ == "__main__":
    key = jax.random.PRNGKey(0)
    N, C, H, W = 1, 448, 7, 7  # shape expected by the original module
    kx, kg, kb = jax.random.split(key, 3)

    x = jax.random.normal(kx, (N, C, H, W), dtype=jnp.float32)
    # Non-trivial affine parameters to exercise the folded scale/shift path.
    gamma = 1.0 + 0.1 * jax.random.normal(kg, (C,), dtype=jnp.float32)
    beta = 0.1 * jax.random.normal(kb, (C,), dtype=jnp.float32)

    y = batchnorm2d(x, gamma, beta, eps=1e-5)
    jax.block_until_ready(y)

    # Pure-JAX reference (training-mode BatchNorm2d: batch stats, biased var).
    mean = jnp.mean(x, axis=(0, 2, 3), keepdims=True)
    var = jnp.mean((x - mean) ** 2, axis=(0, 2, 3), keepdims=True)
    ref = (x - mean) * jax.lax.rsqrt(var + 1e-5) * gamma.reshape(1, C, 1, 1) \
          + beta.reshape(1, C, 1, 1)
    assert jnp.max(jnp.abs(y - ref)) < 1e-4, "mismatch vs reference"

    print("KERNEL_OK")
</pallas_src>

<mosaic_0001>
module attributes {stable_mosaic.version = 11 : i64} {
  func.func @_bn_kernel(%arg0: memref<1x448x49xf32, #tpu.memory_space<vmem>>, %arg1: memref<1x448x1xf32, #tpu.memory_space<vmem>>, %arg2: memref<1x448x1xf32, #tpu.memory_space<vmem>>, %arg3: memref<1x448x49xf32, #tpu.memory_space<vmem>>) attributes {dimension_semantics = [], scalar_prefetch = 0 : i64, scratch_operands = 0 : i64, tpu.core_type = #tpu.core_type<tc>} {
    %c0 = arith.constant 0 : index
    %c0_0 = arith.constant 0 : index
    %c0_1 = arith.constant 0 : index
    %0 = vector.load %arg0[%c0, %c0_0, %c0_1] : memref<1x448x49xf32, #tpu.memory_space<vmem>>, vector<1x448x49xf32>
    %cst = arith.constant dense<0.000000e+00> : vector<448xf32>
    %1 = vector.multi_reduction <add>, %0, %cst [0, 2] : vector<1x448x49xf32> to vector<448xf32>
    %2 = vector.shape_cast %1 : vector<448xf32> to vector<1x448x1xf32>
    %cst_2 = arith.constant 0.0204081628 : f32
    %3 = vector.broadcast %cst_2 : f32 to vector<1x448x1xf32>
    %4 = arith.mulf %2, %3 : vector<1x448x1xf32>
    %5 = vector.broadcast %4 : vector<1x448x1xf32> to vector<1x448x49xf32>
    %6 = arith.subf %0, %5 : vector<1x448x49xf32>
    %7 = arith.mulf %6, %6 : vector<1x448x49xf32>
    %cst_3 = arith.constant dense<0.000000e+00> : vector<448xf32>
    %8 = vector.multi_reduction <add>, %7, %cst_3 [0, 2] : vector<1x448x49xf32> to vector<448xf32>
    %9 = vector.shape_cast %8 : vector<448xf32> to vector<1x448x1xf32>
    %cst_4 = arith.constant 0.0204081628 : f32
    %10 = vector.broadcast %cst_4 : f32 to vector<1x448x1xf32>
    %11 = arith.mulf %9, %10 : vector<1x448x1xf32>
    %cst_5 = arith.constant 9.99999974E-6 : f32
    %12 = vector.broadcast %cst_5 : f32 to vector<1x448x1xf32>
    %13 = arith.addf %11, %12 : vector<1x448x1xf32>
    %14 = math.rsqrt %13 : vector<1x448x1xf32>
    %c0_6 = arith.constant 0 : index
    %c0_7 = arith.constant 0 : index
    %c0_8 = arith.constant 0 : index
    %15 = vector.load %arg1[%c0_6, %c0_7, %c0_8] : memref<1x448x1xf32, #tpu.memory_space<vmem>>, vector<1x448x1xf32>
    %16 = arith.mulf %14, %15 : vector<1x448x1xf32>
    %c0_9 = arith.constant 0 : index
    %c0_10 = arith.constant 0 : index
    %c0_11 = arith.constant 0 : index
    %17 = vector.load %arg2[%c0_9, %c0_10, %c0_11] : memref<1x448x1xf32, #tpu.memory_space<vmem>>, vector<1x448x1xf32>
    %18 = arith.mulf %4, %16 : vector<1x448x1xf32>
    %19 = arith.subf %17, %18 : vector<1x448x1xf32>
    %20 = vector.broadcast %16 : vector<1x448x1xf32> to vector<1x448x49xf32>
    %21 = arith.mulf %0, %20 : vector<1x448x49xf32>
    %22 = vector.broadcast %19 : vector<1x448x1xf32> to vector<1x448x49xf32>
    %23 = arith.addf %21, %22 : vector<1x448x49xf32>
    %c0_12 = arith.constant 0 : index
    %c0_13 = arith.constant 0 : index
    %c0_14 = arith.constant 0 : index
    %24 = vector.load %arg3[%c0_12, %c0_13, %c0_14] : memref<1x448x49xf32, #tpu.memory_space<vmem>>, vector<1x448x49xf32>
    tpu.vector_store %arg3[%c0_12, %c0_13, %c0_14], %23 {strides = array<i32>} : memref<1x448x49xf32, #tpu.memory_space<vmem>>, vector<1x448x49xf32>,
    return
  }
}

</mosaic_0001>

<llo_original>
// kernel: tpu_custom_call.1
$region0: #{tpu_custom_call.1}
  #allocation0 [shape = 'u32[]', space=smem, size = 0x4, offset = 0x4, fixed_abs, tag = 'smem constant byte address 0x4 - core index']
  #allocation1 [shape = 'u32[144,128]{1,0:T(1,128)}', space=vmem, size = 0x12000, scoped, tag = 'internal scratch']
  %s0 = inlined_call_operand.vmem [shape: f32[1,448,49], index: 0, kind: input, shape index: {}]
  %s1 = inlined_call_operand.vmem [shape: f32[1,448,1], index: 1, kind: input, shape index: {}]
  %s2 = inlined_call_operand.vmem [shape: f32[1,448,1], index: 2, kind: input, shape index: {}]
  %s3 = inlined_call_operand.vmem [shape: f32[1,448,49], index: 3, kind: output, shape index: {}]
  %s4 = sld [smem:[#allocation0]]
  $region22: #{tpu_custom_call.1} parent=0
    _
  %s6 = ssub.s32 1, %s4
  %s7 = scalar_select 0, %s6, %s4
  // Predicated region
  $region2: #{tpu_custom_call.1} parent=0 // pred_check
    _
  $region3: #{tpu_custom_call.1} parent=0 // pred_check_branch
    %9 = sbr.rel (0) target = $region5
  $region4: #{tpu_custom_call.1} parent=0 // pred_region
    _
  $region5: #{tpu_custom_call.1} parent=0 // pred_fallthru
    _
  // Predicated region
  $region6: #{tpu_custom_call.1} parent=0 // pred_check
    _
  $region7: #{tpu_custom_call.1} parent=0 // pred_check_branch
    %11 = sbr.rel (0) target = $region9
  $region8: #{tpu_custom_call.1} parent=0 // pred_region
    _
  $region9: #{tpu_custom_call.1} parent=0 // pred_fallthru
    _
  // Predicated region
  $region10: #{tpu_custom_call.1} parent=0 // pred_check
    _
  $region11: #{tpu_custom_call.1} parent=0 // pred_check_branch
    %13 = sbr.rel (0) target = $region13
  $region12: #{tpu_custom_call.1} parent=0 // pred_region
    _
  $region13: #{tpu_custom_call.1} parent=0 // pred_fallthru
    _
  %v14 = vld [vmem:[%s0] sm:$0xff]
  %v15 = vld [vmem:[%s0 + $0x8] sm:$0xff]
  %v16 = vld [vmem:[%s0 + $0x10] sm:$0xff]
  %v17 = vld [vmem:[%s0 + $0x18] sm:$0xff]
  %v18 = vld [vmem:[%s0 + $0x20] sm:$0xff]
  %v19 = vld [vmem:[%s0 + $0x28] sm:$0xff]
  %v20 = vld [vmem:[%s0 + $0x30] sm:$0xff]
  %v21 = vld [vmem:[%s0 + $0x38] sm:$0xff]
  %v22 = vld [vmem:[%s0 + $0x40] sm:$0xff]
  %v23 = vld [vmem:[%s0 + $0x48] sm:$0xff]
  %v24 = vld [vmem:[%s0 + $0x50] sm:$0xff]
  %v25 = vld [vmem:[%s0 + $0x58] sm:$0xff]
  %v26 = vld [vmem:[%s0 + $0x60] sm:$0xff]
  %v27 = vld [vmem:[%s0 + $0x68] sm:$0xff]
  %v28 = vld [vmem:[%s0 + $0x70] sm:$0xff]
  %v29 = vld [vmem:[%s0 + $0x78] sm:$0xff]
  %v30 = vld [vmem:[%s0 + $0x80] sm:$0xff]
  %v31 = vld [vmem:[%s0 + $0x88] sm:$0xff]
  %v32 = vld [vmem:[%s0 + $0x90] sm:$0xff]
  %v33 = vld [vmem:[%s0 + $0x98] sm:$0xff]
  %v34 = vld [vmem:[%s0 + $0xa0] sm:$0xff]
  %v35 = vld [vmem:[%s0 + $0xa8] sm:$0xff]
  %v36 = vld [vmem:[%s0 + $0xb0] sm:$0xff]
  %v37 = vld [vmem:[%s0 + $0xb8] sm:$0xff]
  %v38 = vld [vmem:[%s0 + $0xc0] sm:$0xff]
  %v39 = vld [vmem:[%s0 + $0xc8] sm:$0xff]
  %v40 = vld [vmem:[%s0 + $0xd0] sm:$0xff]
  %v41 = vld [vmem:[%s0 + $0xd8] sm:$0xff]
  %v42 = vld [vmem:[%s0 + $0xe0] sm:$0xff]
  %v43 = vld [vmem:[%s0 + $0xe8] sm:$0xff]
  %v44 = vld [vmem:[%s0 + $0xf0] sm:$0xff]
  %v45 = vld [vmem:[%s0 + $0xf8] sm:$0xff]
  %v46 = vld [vmem:[%s0 + $0x100] sm:$0xff]
  %v47 = vld [vmem:[%s0 + $0x108] sm:$0xff]
  %v48 = vld [vmem:[%s0 + $0x110] sm:$0xff]
  %v49 = vld [vmem:[%s0 + $0x118] sm:$0xff]
  %v50 = vld [vmem:[%s0 + $0x120] sm:$0xff]
  %v51 = vld [vmem:[%s0 + $0x128] sm:$0xff]
  %v52 = vld [vmem:[%s0 + $0x130] sm:$0xff]
  %v53 = vld [vmem:[%s0 + $0x138] sm:$0xff]
  %v54 = vld [vmem:[%s0 + $0x140] sm:$0xff]
  %v55 = vld [vmem:[%s0 + $0x148] sm:$0xff]
  %v56 = vld [vmem:[%s0 + $0x150] sm:$0xff]
  %v57 = vld [vmem:[%s0 + $0x158] sm:$0xff]
  %v58 = vld [vmem:[%s0 + $0x160] sm:$0xff]
  %v59 = vld [vmem:[%s0 + $0x168] sm:$0xff]
  %v60 = vld [vmem:[%s0 + $0x170] sm:$0xff]
  %v61 = vld [vmem:[%s0 + $0x178] sm:$0xff]
  %v62 = vld [vmem:[%s0 + $0x180] sm:$0xff]
  %v63 = vld [vmem:[%s0 + $0x188] sm:$0xff]
  %v64 = vld [vmem:[%s0 + $0x190] sm:$0xff]
  %v65 = vld [vmem:[%s0 + $0x198] sm:$0xff]
  %v66 = vld [vmem:[%s0 + $0x1a0] sm:$0xff]
  %v67 = vld [vmem:[%s0 + $0x1a8] sm:$0xff]
  %v68 = vld [vmem:[%s0 + $0x1b0] sm:$0xff]
  %v69 = vld [vmem:[%s0 + $0x1b8] sm:$0xff]
  %vm70 = vcmask 400384
  %v71 = vsel %vm70, %v14, 0.0
  %72 = vadd.xlane.f32.xlu0 %v71
  %v73 = vpop.xlane.xlu0 %72
  %v74 = vsel %vm70, %v15, 0.0
  %75 = vadd.xlane.f32.xlu0 %v74
  %v76 = vpop.xlane.xlu0 %75
  %v77 = vsel %vm70, %v16, 0.0
  %78 = vadd.xlane.f32.xlu0 %v77
  %v79 = vpop.xlane.xlu0 %78
  %v80 = vsel %vm70, %v17, 0.0
  %81 = vadd.xlane.f32.xlu0 %v80
  %v82 = vpop.xlane.xlu0 %81
  %v83 = vsel %vm70, %v18, 0.0
  %84 = vadd.xlane.f32.xlu0 %v83
  %v85 = vpop.xlane.xlu0 %84
  %v86 = vsel %vm70, %v19, 0.0
  %87 = vadd.xlane.f32.xlu0 %v86
  %v88 = vpop.xlane.xlu0 %87
  %v89 = vsel %vm70, %v20, 0.0
  %90 = vadd.xlane.f32.xlu0 %v89
  %v91 = vpop.xlane.xlu0 %90
  %v92 = vsel %vm70, %v21, 0.0
  %93 = vadd.xlane.f32.xlu0 %v92
  %v94 = vpop.xlane.xlu0 %93
  %v95 = vsel %vm70, %v22, 0.0
  %96 = vadd.xlane.f32.xlu0 %v95
  %v97 = vpop.xlane.xlu0 %96
  %v98 = vsel %vm70, %v23, 0.0
  %99 = vadd.xlane.f32.xlu0 %v98
  %v100 = vpop.xlane.xlu0 %99
  %v101 = vsel %vm70, %v24, 0.0
  %102 = vadd.xlane.f32.xlu0 %v101
  %v103 = vpop.xlane.xlu0 %102
  %v104 = vsel %vm70, %v25, 0.0
  %105 = vadd.xlane.f32.xlu0 %v104
  %v106 = vpop.xlane.xlu0 %105
  %v107 = vsel %vm70, %v26, 0.0
  %108 = vadd.xlane.f32.xlu0 %v107
  %v109 = vpop.xlane.xlu0 %108
  %v110 = vsel %vm70, %v27, 0.0
  %111 = vadd.xlane.f32.xlu0 %v110
  %v112 = vpop.xlane.xlu0 %111
  %v113 = vsel %vm70, %v28, 0.0
  %114 = vadd.xlane.f32.xlu0 %v113
  %v115 = vpop.xlane.xlu0 %114
  %v116 = vsel %vm70, %v29, 0.0
  %117 = vadd.xlane.f32.xlu0 %v116
  %v118 = vpop.xlane.xlu0 %117
  %v119 = vsel %vm70, %v30, 0.0
  %120 = vadd.xlane.f32.xlu0 %v119
  %v121 = vpop.xlane.xlu0 %120
  %v122 = vsel %vm70, %v31, 0.0
  %123 = vadd.xlane.f32.xlu0 %v122
  %v124 = vpop.xlane.xlu0 %123
  %v125 = vsel %vm70, %v32, 0.0
  %126 = vadd.xlane.f32.xlu0 %v125
  %v127 = vpop.xlane.xlu0 %126
  %v128 = vsel %vm70, %v33, 0.0
  %129 = vadd.xlane.f32.xlu0 %v128
  %v130 = vpop.xlane.xlu0 %129
  %v131 = vsel %vm70, %v34, 0.0
  %132 = vadd.xlane.f32.xlu0 %v131
  %v133 = vpop.xlane.xlu0 %132
  %v134 = vsel %vm70, %v35, 0.0
  %135 = vadd.xlane.f32.xlu0 %v134
  %v136 = vpop.xlane.xlu0 %135
  %v137 = vsel %vm70, %v36, 0.0
  %138 = vadd.xlane.f32.xlu0 %v137
  %v139 = vpop.xlane.xlu0 %138
  %v140 = vsel %vm70, %v37, 0.0
  %141 = vadd.xlane.f32.xlu0 %v140
  %v142 = vpop.xlane.xlu0 %141
  %v143 = vsel %vm70, %v38, 0.0
  %144 = vadd.xlane.f32.xlu0 %v143
  %v145 = vpop.xlane.xlu0 %144
  %v146 = vsel %vm70, %v39, 0.0
  %147 = vadd.xlane.f32.xlu0 %v146
  %v148 = vpop.xlane.xlu0 %147
  %v149 = vsel %vm70, %v40, 0.0
  %150 = vadd.xlane.f32.xlu0 %v149
  %v151 = vpop.xlane.xlu0 %150
  %v152 = vsel %vm70, %v41, 0.0
  %153 = vadd.xlane.f32.xlu0 %v152
  %v154 = vpop.xlane.xlu0 %153
  %v155 = vsel %vm70, %v42, 0.0
  %156 = vadd.xlane.f32.xlu0 %v155
  %v157 = vpop.xlane.xlu0 %156
  %v158 = vsel %vm70, %v43, 0.0
  %159 = vadd.xlane.f32.xlu0 %v158
  %v160 = vpop.xlane.xlu0 %159
  %v161 = vsel %vm70, %v44, 0.0
  %162 = vadd.xlane.f32.xlu0 %v161
  %v163 = vpop.xlane.xlu0 %162
  %v164 = vsel %vm70, %v45, 0.0
  %165 = vadd.xlane.f32.xlu0 %v164
  %v166 = vpop.xlane.xlu0 %165
  %v167 = vsel %vm70, %v46, 0.0
  %168 = vadd.xlane.f32.xlu0 %v167
  %v169 = vpop.xlane.xlu0 %168
  %v170 = vsel %vm70, %v47, 0.0
  %171 = vadd.xlane.f32.xlu0 %v170
  %v172 = vpop.xlane.xlu0 %171
  %v173 = vsel %vm70, %v48, 0.0
  %174 = vadd.xlane.f32.xlu0 %v173
  %v175 = vpop.xlane.xlu0 %174
  %v176 = vsel %vm70, %v49, 0.0
  %177 = vadd.xlane.f32.xlu0 %v176
  %v178 = vpop.xlane.xlu0 %177
  %v179 = vsel %vm70, %v50, 0.0
  %180 = vadd.xlane.f32.xlu0 %v179
  %v181 = vpop.xlane.xlu0 %180
  %v182 = vsel %vm70, %v51, 0.0
  %183 = vadd.xlane.f32.xlu0 %v182
  %v184 = vpop.xlane.xlu0 %183
  %v185 = vsel %vm70, %v52, 0.0
  %186 = vadd.xlane.f32.xlu0 %v185
  %v187 = vpop.xlane.xlu0 %186
  %v188 = vsel %vm70, %v53, 0.0
  %189 = vadd.xlane.f32.xlu0 %v188
  %v190 = vpop.xlane.xlu0 %189
  %v191 = vsel %vm70, %v54, 0.0
  %192 = vadd.xlane.f32.xlu0 %v191
  %v193 = vpop.xlane.xlu0 %192
  %v194 = vsel %vm70, %v55, 0.0
  %195 = vadd.xlane.f32.xlu0 %v194
  %v196 = vpop.xlane.xlu0 %195
  %v197 = vsel %vm70, %v56, 0.0
  %198 = vadd.xlane.f32.xlu0 %v197
  %v199 = vpop.xlane.xlu0 %198
  %v200 = vsel %vm70, %v57, 0.0
  %201 = vadd.xlane.f32.xlu0 %v200
  %v202 = vpop.xlane.xlu0 %201
  %v203 = vsel %vm70, %v58, 0.0
  %204 = vadd.xlane.f32.xlu0 %v203
  %v205 = vpop.xlane.xlu0 %204
  %v206 = vsel %vm70, %v59, 0.0
  %207 = vadd.xlane.f32.xlu0 %v206
  %v208 = vpop.xlane.xlu0 %207
  %v209 = vsel %vm70, %v60, 0.0
  %210 = vadd.xlane.f32.xlu0 %v209
  %v211 = vpop.xlane.xlu0 %210
  %v212 = vsel %vm70, %v61, 0.0
  %213 = vadd.xlane.f32.xlu0 %v212
  %v214 = vpop.xlane.xlu0 %213
  %v215 = vsel %vm70, %v62, 0.0
  %216 = vadd.xlane.f32.xlu0 %v215
  %v217 = vpop.xlane.xlu0 %216
  %v218 = vsel %vm70, %v63, 0.0
  %219 = vadd.xlane.f32.xlu0 %v218
  %v220 = vpop.xlane.xlu0 %219
  %v221 = vsel %vm70, %v64, 0.0
  %222 = vadd.xlane.f32.xlu0 %v221
  %v223 = vpop.xlane.xlu0 %222
  %v224 = vsel %vm70, %v65, 0.0
  %225 = vadd.xlane.f32.xlu0 %v224
  %v226 = vpop.xlane.xlu0 %225
  %v227 = vsel %vm70, %v66, 0.0
  %228 = vadd.xlane.f32.xlu0 %v227
  %v229 = vpop.xlane.xlu0 %228
  %v230 = vsel %vm70, %v67, 0.0
  %231 = vadd.xlane.f32.xlu0 %v230
  %v232 = vpop.xlane.xlu0 %231
  %v233 = vsel %vm70, %v68, 0.0
  %234 = vadd.xlane.f32.xlu0 %v233
  %v235 = vpop.xlane.xlu0 %234
  %v236 = vsel %vm70, %v69, 0.0
  %237 = vadd.xlane.f32.xlu0 %v236
  %v238 = vpop.xlane.xlu0 %237
  %v239 = vmul.f32 %v73, 0.020408163
  %v240 = vmul.f32 %v76, 0.020408163
  %v241 = vmul.f32 %v79, 0.020408163
  %v242 = vmul.f32 %v82, 0.020408163
  %v243 = vmul.f32 %v85, 0.020408163
  %v244 = vmul.f32 %v88, 0.020408163
  %v245 = vmul.f32 %v91, 0.020408163
  %v246 = vmul.f32 %v94, 0.020408163
  %v247 = vmul.f32 %v97, 0.020408163
  %v248 = vmul.f32 %v100, 0.020408163
  %v249 = vmul.f32 %v103, 0.020408163
  %v250 = vmul.f32 %v106, 0.020408163
  %v251 = vmul.f32 %v109, 0.020408163
  %v252 = vmul.f32 %v112, 0.020408163
  %v253 = vmul.f32 %v115, 0.020408163
  %v254 = vmul.f32 %v118, 0.020408163
  %v255 = vmul.f32 %v121, 0.020408163
  %v256 = vmul.f32 %v124, 0.020408163
  %v257 = vmul.f32 %v127, 0.020408163
  %v258 = vmul.f32 %v130, 0.020408163
  %v259 = vmul.f32 %v133, 0.020408163
  %v260 = vmul.f32 %v136, 0.020408163
  %v261 = vmul.f32 %v139, 0.020408163
  %v262 = vmul.f32 %v142, 0.020408163
  %v263 = vmul.f32 %v145, 0.020408163
  %v264 = vmul.f32 %v148, 0.020408163
  %v265 = vmul.f32 %v151, 0.020408163
  %v266 = vmul.f32 %v154, 0.020408163
  %v267 = vmul.f32 %v157, 0.020408163
  %v268 = vmul.f32 %v160, 0.020408163
  %v269 = vmul.f32 %v163, 0.020408163
  %v270 = vmul.f32 %v166, 0.020408163
  %v271 = vmul.f32 %v169, 0.020408163
  %v272 = vmul.f32 %v172, 0.020408163
  %v273 = vmul.f32 %v175, 0.020408163
  %v274 = vmul.f32 %v178, 0.020408163
  %v275 = vmul.f32 %v181, 0.020408163
  %v276 = vmul.f32 %v184, 0.020408163
  %v277 = vmul.f32 %v187, 0.020408163
  %v278 = vmul.f32 %v190, 0.020408163
  %v279 = vmul.f32 %v193, 0.020408163
  %v280 = vmul.f32 %v196, 0.020408163
  %v281 = vmul.f32 %v199, 0.020408163
  %v282 = vmul.f32 %v202, 0.020408163
  %v283 = vmul.f32 %v205, 0.020408163
  %v284 = vmul.f32 %v208, 0.020408163
  %v285 = vmul.f32 %v211, 0.020408163
  %v286 = vmul.f32 %v214, 0.020408163
  %v287 = vmul.f32 %v217, 0.020408163
  %v288 = vmul.f32 %v220, 0.020408163
  %v289 = vmul.f32 %v223, 0.020408163
  %v290 = vmul.f32 %v226, 0.020408163
  %v291 = vmul.f32 %v229, 0.020408163
  %v292 = vmul.f32 %v232, 0.020408163
  %v293 = vmul.f32 %v235, 0.020408163
  %v294 = vmul.f32 %v238, 0.020408163
  %v295 = vsub.f32 %v14, %v239
  %v296 = vsub.f32 %v15, %v240
  %v297 = vsub.f32 %v16, %v241
  %v298 = vsub.f32 %v17, %v242
  %v299 = vsub.f32 %v18, %v243
  %v300 = vsub.f32 %v19, %v244
  %v301 = vsub.f32 %v20, %v245
  %v302 = vsub.f32 %v21, %v246
  %v303 = vsub.f32 %v22, %v247
  %v304 = vsub.f32 %v23, %v248
  %v305 = vsub.f32 %v24, %v249
  %v306 = vsub.f32 %v25, %v250
  %v307 = vsub.f32 %v26, %v251
  %v308 = vsub.f32 %v27, %v252
  %v309 = vsub.f32 %v28, %v253
  %v310 = vsub.f32 %v29, %v254
  %v311 = vsub.f32 %v30, %v255
  %v312 = vsub.f32 %v31, %v256
  %v313 = vsub.f32 %v32, %v257
  %v314 = vsub.f32 %v33, %v258
  %v315 = vsub.f32 %v34, %v259
  %v316 = vsub.f32 %v35, %v260
  %v317 = vsub.f32 %v36, %v261
  %v318 = vsub.f32 %v37, %v262
  %v319 = vsub.f32 %v38, %v263
  %v320 = vsub.f32 %v39, %v264
  %v321 = vsub.f32 %v40, %v265
  %v322 = vsub.f32 %v41, %v266
  %v323 = vsub.f32 %v42, %v267
  %v324 = vsub.f32 %v43, %v268
  %v325 = vsub.f32 %v44, %v269
  %v326 = vsub.f32 %v45, %v270
  %v327 = vsub.f32 %v46, %v271
  %v328 = vsub.f32 %v47, %v272
  %v329 = vsub.f32 %v48, %v273
  %v330 = vsub.f32 %v49, %v274
  %v331 = vsub.f32 %v50, %v275
  %v332 = vsub.f32 %v51, %v276
  %v333 = vsub.f32 %v52, %v277
  %v334 = vsub.f32 %v53, %v278
  %v335 = vsub.f32 %v54, %v279
  %v336 = vsub.f32 %v55, %v280
  %v337 = vsub.f32 %v56, %v281
  %v338 = vsub.f32 %v57, %v282
  %v339 = vsub.f32 %v58, %v283
  %v340 = vsub.f32 %v59, %v284
  %v341 = vsub.f32 %v60, %v285
  %v342 = vsub.f32 %v61, %v286
  %v343 = vsub.f32 %v62, %v287
  %v344 = vsub.f32 %v63, %v288
  %v345 = vsub.f32 %v64, %v289
  %v346 = vsub.f32 %v65, %v290
  %v347 = vsub.f32 %v66, %v291
  %v348 = vsub.f32 %v67, %v292
  %v349 = vsub.f32 %v68, %v293
  %v350 = vsub.f32 %v69, %v294
  %v351 = vmul.f32 %v295, %v295
  %v352 = vmul.f32 %v296, %v296
  %v353 = vmul.f32 %v297, %v297
  %v354 = vmul.f32 %v298, %v298
  %v355 = vmul.f32 %v299, %v299
  %v356 = vmul.f32 %v300, %v300
  %v357 = vmul.f32 %v301, %v301
  %v358 = vmul.f32 %v302, %v302
  %v359 = vmul.f32 %v303, %v303
  %v360 = vmul.f32 %v304, %v304
  %v361 = vmul.f32 %v305, %v305
  %v362 = vmul.f32 %v306, %v306
  %v363 = vmul.f32 %v307, %v307
  %v364 = vmul.f32 %v308, %v308
  %v365 = vmul.f32 %v309, %v309
  %v366 = vmul.f32 %v310, %v310
  %v367 = vmul.f32 %v311, %v311
  %v368 = vmul.f32 %v312, %v312
  %v369 = vmul.f32 %v313, %v313
  %v370 = vmul.f32 %v314, %v314
  %v371 = vmul.f32 %v315, %v315
  %v372 = vmul.f32 %v316, %v316
  %v373 = vmul.f32 %v317, %v317
  %v374 = vmul.f32 %v318, %v318
  %v375 = vmul.f32 %v319, %v319
  %v376 = vmul.f32 %v320, %v320
  %v377 = vmul.f32 %v321, %v321
  %v378 = vmul.f32 %v322, %v322
  %v379 = vmul.f32 %v323, %v323
  %v380 = vmul.f32 %v324, %v324
  %v381 = vmul.f32 %v325, %v325
  %v382 = vmul.f32 %v326, %v326
  %v383 = vmul.f32 %v327, %v327
  %v384 = vmul.f32 %v328, %v328
  %v385 = vmul.f32 %v329, %v329
  %v386 = vmul.f32 %v330, %v330
  %v387 = vmul.f32 %v331, %v331
  %v388 = vmul.f32 %v332, %v332
  %v389 = vmul.f32 %v333, %v333
  %v390 = vmul.f32 %v334, %v334
  %v391 = vmul.f32 %v335, %v335
  %v392 = vmul.f32 %v336, %v336
  %v393 = vmul.f32 %v337, %v337
  %v394 = vmul.f32 %v338, %v338
  %v395 = vmul.f32 %v339, %v339
  %v396 = vmul.f32 %v340, %v340
  %v397 = vmul.f32 %v341, %v341
  %v398 = vmul.f32 %v342, %v342
  %v399 = vmul.f32 %v343, %v343
  %v400 = vmul.f32 %v344, %v344
  %v401 = vmul.f32 %v345, %v345
  %v402 = vmul.f32 %v346, %v346
  %v403 = vmul.f32 %v347, %v347
  %v404 = vmul.f32 %v348, %v348
  %v405 = vmul.f32 %v349, %v349
  %v406 = vmul.f32 %v350, %v350
  %v407 = vsel %vm70, %v351, 0.0
  %408 = vadd.xlane.f32.xlu0 %v407
  %v409 = vpop.xlane.xlu0 %408
  %v410 = vsel %vm70, %v352, 0.0
  %411 = vadd.xlane.f32.xlu0 %v410
  %v412 = vpop.xlane.xlu0 %411
  %v413 = vsel %vm70, %v353, 0.0
  %414 = vadd.xlane.f32.xlu0 %v413
  %v415 = vpop.xlane.xlu0 %414
  %v416 = vsel %vm70, %v354, 0.0
  %417 = vadd.xlane.f32.xlu0 %v416
  %v418 = vpop.xlane.xlu0 %417
  %v419 = vsel %vm70, %v355, 0.0
  %420 = vadd.xlane.f32.xlu0 %v419
  %v421 = vpop.xlane.xlu0 %420
  %v422 = vsel %vm70, %v356, 0.0
  %423 = vadd.xlane.f32.xlu0 %v422
  %v424 = vpop.xlane.xlu0 %423
  %v425 = vsel %vm70, %v357, 0.0
  %426 = vadd.xlane.f32.xlu0 %v425
  %v427 = vpop.xlane.xlu0 %426
  %v428 = vsel %vm70, %v358, 0.0
  %429 = vadd.xlane.f32.xlu0 %v428
  %v430 = vpop.xlane.xlu0 %429
  %v431 = vsel %vm70, %v359, 0.0
  %432 = vadd.xlane.f32.xlu0 %v431
  %v433 = vpop.xlane.xlu0 %432
  %v434 = vsel %vm70, %v360, 0.0
  %435 = vadd.xlane.f32.xlu0 %v434
  %v436 = vpop.xlane.xlu0 %435
  %v437 = vsel %vm70, %v361, 0.0
  %438 = vadd.xlane.f32.xlu0 %v437
  %v439 = vpop.xlane.xlu0 %438
  %v440 = vsel %vm70, %v362, 0.0
  %441 = vadd.xlane.f32.xlu0 %v440
  %v442 = vpop.xlane.xlu0 %441
  %v443 = vsel %vm70, %v363, 0.0
  %444 = vadd.xlane.f32.xlu0 %v443
  %v445 = vpop.xlane.xlu0 %444
  %v446 = vsel %vm70, %v364, 0.0
  %447 = vadd.xlane.f32.xlu0 %v446
  %v448 = vpop.xlane.xlu0 %447
  %v449 = vsel %vm70, %v365, 0.0
  %450 = vadd.xlane.f32.xlu0 %v449
  %v451 = vpop.xlane.xlu0 %450
  %v452 = vsel %vm70, %v366, 0.0
  %453 = vadd.xlane.f32.xlu0 %v452
  %v454 = vpop.xlane.xlu0 %453
  %v455 = vsel %vm70, %v367, 0.0
  %456 = vadd.xlane.f32.xlu0 %v455
  %v457 = vpop.xlane.xlu0 %456
  %v458 = vsel %vm70, %v368, 0.0
  %459 = vadd.xlane.f32.xlu0 %v458
  %v460 = vpop.xlane.xlu0 %459
  %v461 = vsel %vm70, %v369, 0.0
  %462 = vadd.xlane.f32.xlu0 %v461
  %v463 = vpop.xlane.xlu0 %462
  %v464 = vsel %vm70, %v370, 0.0
  %465 = vadd.xlane.f32.xlu0 %v464
  %v466 = vpop.xlane.xlu0 %465
  %v467 = vsel %vm70, %v371, 0.0
  %468 = vadd.xlane.f32.xlu0 %v467
  %v469 = vpop.xlane.xlu0 %468
  %v470 = vsel %vm70, %v372, 0.0
  %471 = vadd.xlane.f32.xlu0 %v470
  %v472 = vpop.xlane.xlu0 %471
  %v473 = vsel %vm70, %v373, 0.0
  %474 = vadd.xlane.f32.xlu0 %v473
  %v475 = vpop.xlane.xlu0 %474
  %v476 = vsel %vm70, %v374, 0.0
  %477 = vadd.xlane.f32.xlu0 %v476
  %v478 = vpop.xlane.xlu0 %477
  %v479 = vsel %vm70, %v375, 0.0
  %480 = vadd.xlane.f32.xlu0 %v479
  %v481 = vpop.xlane.xlu0 %480
  %v482 = vsel %vm70, %v376, 0.0
  %483 = vadd.xlane.f32.xlu0 %v482
  %v484 = vpop.xlane.xlu0 %483
  %v485 = vsel %vm70, %v377, 0.0
  %486 = vadd.xlane.f32.xlu0 %v485
  %v487 = vpop.xlane.xlu0 %486
  %v488 = vsel %vm70, %v378, 0.0
  %489 = vadd.xlane.f32.xlu0 %v488
  %v490 = vpop.xlane.xlu0 %489
  %v491 = vsel %vm70, %v379, 0.0
  %492 = vadd.xlane.f32.xlu0 %v491
  %v493 = vpop.xlane.xlu0 %492
  %v494 = vsel %vm70, %v380, 0.0
  %495 = vadd.xlane.f32.xlu0 %v494
  %v496 = vpop.xlane.xlu0 %495
  %v497 = vsel %vm70, %v381, 0.0
  %498 = vadd.xlane.f32.xlu0 %v497
  %v499 = vpop.xlane.xlu0 %498
  %v500 = vsel %vm70, %v382, 0.0
  %501 = vadd.xlane.f32.xlu0 %v500
  %v502 = vpop.xlane.xlu0 %501
  %v503 = vsel %vm70, %v383, 0.0
  %504 = vadd.xlane.f32.xlu0 %v503
  %v505 = vpop.xlane.xlu0 %504
  %v506 = vsel %vm70, %v384, 0.0
  %507 = vadd.xlane.f32.xlu0 %v506
  %v508 = vpop.xlane.xlu0 %507
  %v509 = vsel %vm70, %v385, 0.0
  %510 = vadd.xlane.f32.xlu0 %v509
  %v511 = vpop.xlane.xlu0 %510
  %v512 = vsel %vm70, %v386, 0.0
  %513 = vadd.xlane.f32.xlu0 %v512
  %v514 = vpop.xlane.xlu0 %513
  %v515 = vsel %vm70, %v387, 0.0
  %516 = vadd.xlane.f32.xlu0 %v515
  %v517 = vpop.xlane.xlu0 %516
  %v518 = vsel %vm70, %v388, 0.0
  %519 = vadd.xlane.f32.xlu0 %v518
  %v520 = vpop.xlane.xlu0 %519
  %v521 = vsel %vm70, %v389, 0.0
  %522 = vadd.xlane.f32.xlu0 %v521
  %v523 = vpop.xlane.xlu0 %522
  %v524 = vsel %vm70, %v390, 0.0
  %525 = vadd.xlane.f32.xlu0 %v524
  %v526 = vpop.xlane.xlu0 %525
  %v527 = vsel %vm70, %v391, 0.0
  %528 = vadd.xlane.f32.xlu0 %v527
  %v529 = vpop.xlane.xlu0 %528
  %v530 = vsel %vm70, %v392, 0.0
  %531 = vadd.xlane.f32.xlu0 %v530
  %v532 = vpop.xlane.xlu0 %531
  %v533 = vsel %vm70, %v393, 0.0
  %534 = vadd.xlane.f32.xlu0 %v533
  %v535 = vpop.xlane.xlu0 %534
  %v536 = vsel %vm70, %v394, 0.0
  %537 = vadd.xlane.f32.xlu0 %v536
  %v538 = vpop.xlane.xlu0 %537
  %v539 = vsel %vm70, %v395, 0.0
  %540 = vadd.xlane.f32.xlu0 %v539
  %v541 = vpop.xlane.xlu0 %540
  %v542 = vsel %vm70, %v396, 0.0
  %543 = vadd.xlane.f32.xlu0 %v542
  %v544 = vpop.xlane.xlu0 %543
  %v545 = vsel %vm70, %v397, 0.0
  %546 = vadd.xlane.f32.xlu0 %v545
  %v547 = vpop.xlane.xlu0 %546
  %v548 = vsel %vm70, %v398, 0.0
  %549 = vadd.xlane.f32.xlu0 %v548
  %v550 = vpop.xlane.xlu0 %549
  %v551 = vsel %vm70, %v399, 0.0
  %552 = vadd.xlane.f32.xlu0 %v551
  %v553 = vpop.xlane.xlu0 %552
  %v554 = vsel %vm70, %v400, 0.0
  %555 = vadd.xlane.f32.xlu0 %v554
  %v556 = vpop.xlane.xlu0 %555
  %v557 = vsel %vm70, %v401, 0.0
  %558 = vadd.xlane.f32.xlu0 %v557
  %v559 = vpop.xlane.xlu0 %558
  %v560 = vsel %vm70, %v402, 0.0
  %561 = vadd.xlane.f32.xlu0 %v560
  %v562 = vpop.xlane.xlu0 %561
  %v563 = vsel %vm70, %v403, 0.0
  %564 = vadd.xlane.f32.xlu0 %v563
  %v565 = vpop.xlane.xlu0 %564
  %v566 = vsel %vm70, %v404, 0.0
  %567 = vadd.xlane.f32.xlu0 %v566
  %v568 = vpop.xlane.xlu0 %567
  %v569 = vsel %vm70, %v405, 0.0
  %570 = vadd.xlane.f32.xlu0 %v569
  %v571 = vpop.xlane.xlu0 %570
  %v572 = vsel %vm70, %v406, 0.0
  %573 = vadd.xlane.f32.xlu0 %v572
  %v574 = vpop.xlane.xlu0 %573
  %v575 = vmul.f32 %v409, 0.020408163
  %v576 = vmul.f32 %v412, 0.020408163
  %v577 = vmul.f32 %v415, 0.020408163
  %v578 = vmul.f32 %v418, 0.020408163
  %v579 = vmul.f32 %v421, 0.020408163
  %v580 = vmul.f32 %v424, 0.020408163
  %v581 = vmul.f32 %v427, 0.020408163
  %v582 = vmul.f32 %v430, 0.020408163
  %v583 = vmul.f32 %v433, 0.020408163
  %v584 = vmul.f32 %v436, 0.020408163
  %v585 = vmul.f32 %v439, 0.020408163
  %v586 = vmul.f32 %v442, 0.020408163
  %v587 = vmul.f32 %v445, 0.020408163
  %v588 = vmul.f32 %v448, 0.020408163
  %v589 = vmul.f32 %v451, 0.020408163
  %v590 = vmul.f32 %v454, 0.020408163
  %v591 = vmul.f32 %v457, 0.020408163
  %v592 = vmul.f32 %v460, 0.020408163
  %v593 = vmul.f32 %v463, 0.020408163
  %v594 = vmul.f32 %v466, 0.020408163
  %v595 = vmul.f32 %v469, 0.020408163
  %v596 = vmul.f32 %v472, 0.020408163
  %v597 = vmul.f32 %v475, 0.020408163
  %v598 = vmul.f32 %v478, 0.020408163
  %v599 = vmul.f32 %v481, 0.020408163
  %v600 = vmul.f32 %v484, 0.020408163
  %v601 = vmul.f32 %v487, 0.020408163
  %v602 = vmul.f32 %v490, 0.020408163
  %v603 = vmul.f32 %v493, 0.020408163
  %v604 = vmul.f32 %v496, 0.020408163
  %v605 = vmul.f32 %v499, 0.020408163
  %v606 = vmul.f32 %v502, 0.020408163
  %v607 = vmul.f32 %v505, 0.020408163
  %v608 = vmul.f32 %v508, 0.020408163
  %v609 = vmul.f32 %v511, 0.020408163
  %v610 = vmul.f32 %v514, 0.020408163
  %v611 = vmul.f32 %v517, 0.020408163
  %v612 = vmul.f32 %v520, 0.020408163
  %v613 = vmul.f32 %v523, 0.020408163
  %v614 = vmul.f32 %v526, 0.020408163
  %v615 = vmul.f32 %v529, 0.020408163
  %v616 = vmul.f32 %v532, 0.020408163
  %v617 = vmul.f32 %v535, 0.020408163
  %v618 = vmul.f32 %v538, 0.020408163
  %v619 = vmul.f32 %v541, 0.020408163
  %v620 = vmul.f32 %v544, 0.020408163
  %v621 = vmul.f32 %v547, 0.020408163
  %v622 = vmul.f32 %v550, 0.020408163
  %v623 = vmul.f32 %v553, 0.020408163
  %v624 = vmul.f32 %v556, 0.020408163
  %v625 = vmul.f32 %v559, 0.020408163
  %v626 = vmul.f32 %v562, 0.020408163
  %v627 = vmul.f32 %v565, 0.020408163
  %v628 = vmul.f32 %v568, 0.020408163
  %v629 = vmul.f32 %v571, 0.020408163
  %v630 = vmul.f32 %v574, 0.020408163
  %v631 = vadd.f32 %v575, 1e-05
  %v632 = vadd.f32 %v576, 1e-05
  %v633 = vadd.f32 %v577, 1e-05
  %v634 = vadd.f32 %v578, 1e-05
  %v635 = vadd.f32 %v579, 1e-05
  %v636 = vadd.f32 %v580, 1e-05
  %v637 = vadd.f32 %v581, 1e-05
  %v638 = vadd.f32 %v582, 1e-05
  %v639 = vadd.f32 %v583, 1e-05
  %v640 = vadd.f32 %v584, 1e-05
  %v641 = vadd.f32 %v585, 1e-05
  %v642 = vadd.f32 %v586, 1e-05
  %v643 = vadd.f32 %v587, 1e-05
  %v644 = vadd.f32 %v588, 1e-05
  %v645 = vadd.f32 %v589, 1e-05
  %v646 = vadd.f32 %v590, 1e-05
  %v647 = vadd.f32 %v591, 1e-05
  %v648 = vadd.f32 %v592, 1e-05
  %v649 = vadd.f32 %v593, 1e-05
  %v650 = vadd.f32 %v594, 1e-05
  %v651 = vadd.f32 %v595, 1e-05
  %v652 = vadd.f32 %v596, 1e-05
  %v653 = vadd.f32 %v597, 1e-05
  %v654 = vadd.f32 %v598, 1e-05
  %v655 = vadd.f32 %v599, 1e-05
  %v656 = vadd.f32 %v600, 1e-05
  %v657 = vadd.f32 %v601, 1e-05
  %v658 = vadd.f32 %v602, 1e-05
  %v659 = vadd.f32 %v603, 1e-05
  %v660 = vadd.f32 %v604, 1e-05
  %v661 = vadd.f32 %v605, 1e-05
  %v662 = vadd.f32 %v606, 1e-05
  %v663 = vadd.f32 %v607, 1e-05
  %v664 = vadd.f32 %v608, 1e-05
  %v665 = vadd.f32 %v609, 1e-05
  %v666 = vadd.f32 %v610, 1e-05
  %v667 = vadd.f32 %v611, 1e-05
  %v668 = vadd.f32 %v612, 1e-05
  %v669 = vadd.f32 %v613, 1e-05
  %v670 = vadd.f32 %v614, 1e-05
  %v671 = vadd.f32 %v615, 1e-05
  %v672 = vadd.f32 %v616, 1e-05
  %v673 = vadd.f32 %v617, 1e-05
  %v674 = vadd.f32 %v618, 1e-05
  %v675 = vadd.f32 %v619, 1e-05
  %v676 = vadd.f32 %v620, 1e-05
  %v677 = vadd.f32 %v621, 1e-05
  %v678 = vadd.f32 %v622, 1e-05
  %v679 = vadd.f32 %v623, 1e-05
  %v680 = vadd.f32 %v624, 1e-05
  %v681 = vadd.f32 %v625, 1e-05
  %v682 = vadd.f32 %v626, 1e-05
  %v683 = vadd.f32 %v627, 1e-05
  %v684 = vadd.f32 %v628, 1e-05
  %v685 = vadd.f32 %v629, 1e-05
  %v686 = vadd.f32 %v630, 1e-05
  %v687 = vrsqrt.pop %v631
  %v688 = vrsqrt.pop %v632
  %v689 = vrsqrt.pop %v633
  %v690 = vrsqrt.pop %v634
  %v691 = vrsqrt.pop %v635
  %v692 = vrsqrt.pop %v636
  %v693 = vrsqrt.pop %v637
  %v694 = vrsqrt.pop %v638
  %v695 = vrsqrt.pop %v639
  %v696 = vrsqrt.pop %v640
  %v697 = vrsqrt.pop %v641
  %v698 = vrsqrt.pop %v642
  %v699 = vrsqrt.pop %v643
  %v700 = vrsqrt.pop %v644
  %v701 = vrsqrt.pop %v645
  %v702 = vrsqrt.pop %v646
  %v703 = vrsqrt.pop %v647
  %v704 = vrsqrt.pop %v648
  %v705 = vrsqrt.pop %v649
  %v706 = vrsqrt.pop %v650
  %v707 = vrsqrt.pop %v651
  %v708 = vrsqrt.pop %v652
  %v709 = vrsqrt.pop %v653
  %v710 = vrsqrt.pop %v654
  %v711 = vrsqrt.pop %v655
  %v712 = vrsqrt.pop %v656
  %v713 = vrsqrt.pop %v657
  %v714 = vrsqrt.pop %v658
  %v715 = vrsqrt.pop %v659
  %v716 = vrsqrt.pop %v660
  %v717 = vrsqrt.pop %v661
  %v718 = vrsqrt.pop %v662
  %v719 = vrsqrt.pop %v663
  %v720 = vrsqrt.pop %v664
  %v721 = vrsqrt.pop %v665
  %v722 = vrsqrt.pop %v666
  %v723 = vrsqrt.pop %v667
  %v724 = vrsqrt.pop %v668
  %v725 = vrsqrt.pop %v669
  %v726 = vrsqrt.pop %v670
  %v727 = vrsqrt.pop %v671
  %v728 = vrsqrt.pop %v672
  %v729 = vrsqrt.pop %v673
  %v730 = vrsqrt.pop %v674
  %v731 = vrsqrt.pop %v675
  %v732 = vrsqrt.pop %v676
  %v733 = vrsqrt.pop %v677
  %v734 = vrsqrt.pop %v678
  %v735 = vrsqrt.pop %v679
  %v736 = vrsqrt.pop %v680
  %v737 = vrsqrt.pop %v681
  %v738 = vrsqrt.pop %v682
  %v739 = vrsqrt.pop %v683
  %v740 = vrsqrt.pop %v684
  %v741 = vrsqrt.pop %v685
  %v742 = vrsqrt.pop %v686
  %v743 = vld [vmem:[%s1] sm:$0xff]
  %v744 = vld [vmem:[%s1 + $0x8] sm:$0xff]
  %v745 = vld [vmem:[%s1 + $0x10] sm:$0xff]
  %v746 = vld [vmem:[%s1 + $0x18] sm:$0xff]
  %v747 = vld [vmem:[%s1 + $0x20] sm:$0xff]
  %v748 = vld [vmem:[%s1 + $0x28] sm:$0xff]
  %v749 = vld [vmem:[%s1 + $0x30] sm:$0xff]
  %v750 = vld [vmem:[%s1 + $0x38] sm:$0xff]
  %v751 = vld [vmem:[%s1 + $0x40] sm:$0xff]
  %v752 = vld [vmem:[%s1 + $0x48] sm:$0xff]
  %v753 = vld [vmem:[%s1 + $0x50] sm:$0xff]
  %v754 = vld [vmem:[%s1 + $0x58] sm:$0xff]
  %v755 = vld [vmem:[%s1 + $0x60] sm:$0xff]
  %v756 = vld [vmem:[%s1 + $0x68] sm:$0xff]
  %v757 = vld [vmem:[%s1 + $0x70] sm:$0xff]
  %v758 = vld [vmem:[%s1 + $0x78] sm:$0xff]
  %v759 = vld [vmem:[%s1 + $0x80] sm:$0xff]
  %v760 = vld [vmem:[%s1 + $0x88] sm:$0xff]
  %v761 = vld [vmem:[%s1 + $0x90] sm:$0xff]
  %v762 = vld [vmem:[%s1 + $0x98] sm:$0xff]
  %v763 = vld [vmem:[%s1 + $0xa0] sm:$0xff]
  %v764 = vld [vmem:[%s1 + $0xa8] sm:$0xff]
  %v765 = vld [vmem:[%s1 + $0xb0] sm:$0xff]
  %v766 = vld [vmem:[%s1 + $0xb8] sm:$0xff]
  %v767 = vld [vmem:[%s1 + $0xc0] sm:$0xff]
  %v768 = vld [vmem:[%s1 + $0xc8] sm:$0xff]
  %v769 = vld [vmem:[%s1 + $0xd0] sm:$0xff]
  %v770 = vld [vmem:[%s1 + $0xd8] sm:$0xff]
  %v771 = vld [vmem:[%s1 + $0xe0] sm:$0xff]
  %v772 = vld [vmem:[%s1 + $0xe8] sm:$0xff]
  %v773 = vld [vmem:[%s1 + $0xf0] sm:$0xff]
  %v774 = vld [vmem:[%s1 + $0xf8] sm:$0xff]
  %v775 = vld [vmem:[%s1 + $0x100] sm:$0xff]
  %v776 = vld [vmem:[%s1 + $0x108] sm:$0xff]
  %v777 = vld [vmem:[%s1 + $0x110] sm:$0xff]
  %v778 = vld [vmem:[%s1 + $0x118] sm:$0xff]
  %v779 = vld [vmem:[%s1 + $0x120] sm:$0xff]
  %v780 = vld [vmem:[%s1 + $0x128] sm:$0xff]
  %v781 = vld [vmem:[%s1 + $0x130] sm:$0xff]
  %v782 = vld [vmem:[%s1 + $0x138] sm:$0xff]
  %v783 = vld [vmem:[%s1 + $0x140] sm:$0xff]
  %v784 = vld [vmem:[%s1 + $0x148] sm:$0xff]
  %v785 = vld [vmem:[%s1 + $0x150] sm:$0xff]
  %v786 = vld [vmem:[%s1 + $0x158] sm:$0xff]
  %v787 = vld [vmem:[%s1 + $0x160] sm:$0xff]
  %v788 = vld [vmem:[%s1 + $0x168] sm:$0xff]
  %v789 = vld [vmem:[%s1 + $0x170] sm:$0xff]
  %v790 = vld [vmem:[%s1 + $0x178] sm:$0xff]
  %v791 = vld [vmem:[%s1 + $0x180] sm:$0xff]
  %v792 = vld [vmem:[%s1 + $0x188] sm:$0xff]
  %v793 = vld [vmem:[%s1 + $0x190] sm:$0xff]
  %v794 = vld [vmem:[%s1 + $0x198] sm:$0xff]
  %v795 = vld [vmem:[%s1 + $0x1a0] sm:$0xff]
  %v796 = vld [vmem:[%s1 + $0x1a8] sm:$0xff]
  %v797 = vld [vmem:[%s1 + $0x1b0] sm:$0xff]
  %v798 = vld [vmem:[%s1 + $0x1b8] sm:$0xff]
  %v799 = vmul.f32 %v687, %v743
  %v800 = vmul.f32 %v688, %v744
  %v801 = vmul.f32 %v689, %v745
  %v802 = vmul.f32 %v690, %v746
  %v803 = vmul.f32 %v691, %v747
  %v804 = vmul.f32 %v692, %v748
  %v805 = vmul.f32 %v693, %v749
  %v806 = vmul.f32 %v694, %v750
  %v807 = vmul.f32 %v695, %v751
  %v808 = vmul.f32 %v696, %v752
  %v809 = vmul.f32 %v697, %v753
  %v810 = vmul.f32 %v698, %v754
  %v811 = vmul.f32 %v699, %v755
  %v812 = vmul.f32 %v700, %v756
  %v813 = vmul.f32 %v701, %v757
  %v814 = vmul.f32 %v702, %v758
  %v815 = vmul.f32 %v703, %v759
  %v816 = vmul.f32 %v704, %v760
  %v817 = vmul.f32 %v705, %v761
  %v818 = vmul.f32 %v706, %v762
  %v819 = vmul.f32 %v707, %v763
  %v820 = vmul.f32 %v708, %v764
  %v821 = vmul.f32 %v709, %v765
  %v822 = vmul.f32 %v710, %v766
  %v823 = vmul.f32 %v711, %v767
  %v824 = vmul.f32 %v712, %v768
  %v825 = vmul.f32 %v713, %v769
  %v826 = vmul.f32 %v714, %v770
  %v827 = vmul.f32 %v715, %v771
  %v828 = vmul.f32 %v716, %v772
  %v829 = vmul.f32 %v717, %v773
  %v830 = vmul.f32 %v718, %v774
  %v831 = vmul.f32 %v719, %v775
  %v832 = vmul.f32 %v720, %v776
  %v833 = vmul.f32 %v721, %v777
  %v834 = vmul.f32 %v722, %v778
  %v835 = vmul.f32 %v723, %v779
  %v836 = vmul.f32 %v724, %v780
  %v837 = vmul.f32 %v725, %v781
  %v838 = vmul.f32 %v726, %v782
  %v839 = vmul.f32 %v727, %v783
  %v840 = vmul.f32 %v728, %v784
  %v841 = vmul.f32 %v729, %v785
  %v842 = vmul.f32 %v730, %v786
  %v843 = vmul.f32 %v731, %v787
  %v844 = vmul.f32 %v732, %v788
  %v845 = vmul.f32 %v733, %v789
  %v846 = vmul.f32 %v734, %v790
  %v847 = vmul.f32 %v735, %v791
  %v848 = vmul.f32 %v736, %v792
  %v849 = vmul.f32 %v737, %v793
  %v850 = vmul.f32 %v738, %v794
  %v851 = vmul.f32 %v739, %v795
  %v852 = vmul.f32 %v740, %v796
  %v853 = vmul.f32 %v741, %v797
  %v854 = vmul.f32 %v742, %v798
  %v855 = vld [vmem:[%s2] sm:$0xff]
  %v856 = vld [vmem:[%s2 + $0x8] sm:$0xff]
  %v857 = vld [vmem:[%s2 + $0x10] sm:$0xff]
  %v858 = vld [vmem:[%s2 + $0x18] sm:$0xff]
  %v859 = vld [vmem:[%s2 + $0x20] sm:$0xff]
  %v860 = vld [vmem:[%s2 + $0x28] sm:$0xff]
  %v861 = vld [vmem:[%s2 + $0x30] sm:$0xff]
  %v862 = vld [vmem:[%s2 + $0x38] sm:$0xff]
  %v863 = vld [vmem:[%s2 + $0x40] sm:$0xff]
  %v864 = vld [vmem:[%s2 + $0x48] sm:$0xff]
  %v865 = vld [vmem:[%s2 + $0x50] sm:$0xff]
  %v866 = vld [vmem:[%s2 + $0x58] sm:$0xff]
  %v867 = vld [vmem:[%s2 + $0x60] sm:$0xff]
  %v868 = vld [vmem:[%s2 + $0x68] sm:$0xff]
  %v869 = vld [vmem:[%s2 + $0x70] sm:$0xff]
  %v870 = vld [vmem:[%s2 + $0x78] sm:$0xff]
  %v871 = vld [vmem:[%s2 + $0x80] sm:$0xff]
  %v872 = vld [vmem:[%s2 + $0x88] sm:$0xff]
  %v873 = vld [vmem:[%s2 + $0x90] sm:$0xff]
  %v874 = vld [vmem:[%s2 + $0x98] sm:$0xff]
  %v875 = vld [vmem:[%s2 + $0xa0] sm:$0xff]
  %v876 = vld [vmem:[%s2 + $0xa8] sm:$0xff]
  %v877 = vld [vmem:[%s2 + $0xb0] sm:$0xff]
  %v878 = vld [vmem:[%s2 + $0xb8] sm:$0xff]
  %v879 = vld [vmem:[%s2 + $0xc0] sm:$0xff]
  %v880 = vld [vmem:[%s2 + $0xc8] sm:$0xff]
  %v881 = vld [vmem:[%s2 + $0xd0] sm:$0xff]
  %v882 = vld [vmem:[%s2 + $0xd8] sm:$0xff]
  %v883 = vld [vmem:[%s2 + $0xe0] sm:$0xff]
  %v884 = vld [vmem:[%s2 + $0xe8] sm:$0xff]
  %v885 = vld [vmem:[%s2 + $0xf0] sm:$0xff]
  %v886 = vld [vmem:[%s2 + $0xf8] sm:$0xff]
  %v887 = vld [vmem:[%s2 + $0x100] sm:$0xff]
  %v888 = vld [vmem:[%s2 + $0x108] sm:$0xff]
  %v889 = vld [vmem:[%s2 + $0x110] sm:$0xff]
  %v890 = vld [vmem:[%s2 + $0x118] sm:$0xff]
  %v891 = vld [vmem:[%s2 + $0x120] sm:$0xff]
  %v892 = vld [vmem:[%s2 + $0x128] sm:$0xff]
  %v893 = vld [vmem:[%s2 + $0x130] sm:$0xff]
  %v894 = vld [vmem:[%s2 + $0x138] sm:$0xff]
  %v895 = vld [vmem:[%s2 + $0x140] sm:$0xff]
  %v896 = vld [vmem:[%s2 + $0x148] sm:$0xff]
  %v897 = vld [vmem:[%s2 + $0x150] sm:$0xff]
  %v898 = vld [vmem:[%s2 + $0x158] sm:$0xff]
  %v899 = vld [vmem:[%s2 + $0x160] sm:$0xff]
  %v900 = vld [vmem:[%s2 + $0x168] sm:$0xff]
  %v901 = vld [vmem:[%s2 + $0x170] sm:$0xff]
  %v902 = vld [vmem:[%s2 + $0x178] sm:$0xff]
  %v903 = vld [vmem:[%s2 + $0x180] sm:$0xff]
  %v904 = vld [vmem:[%s2 + $0x188] sm:$0xff]
  %v905 = vld [vmem:[%s2 + $0x190] sm:$0xff]
  %v906 = vld [vmem:[%s2 + $0x198] sm:$0xff]
  %v907 = vld [vmem:[%s2 + $0x1a0] sm:$0xff]
  %v908 = vld [vmem:[%s2 + $0x1a8] sm:$0xff]
  %v909 = vld [vmem:[%s2 + $0x1b0] sm:$0xff]
  %v910 = vld [vmem:[%s2 + $0x1b8] sm:$0xff]
  %v911 = vmul.f32 %v239, %v799
  %v912 = vmul.f32 %v240, %v800
  %v913 = vmul.f32 %v241, %v801
  %v914 = vmul.f32 %v242, %v802
  %v915 = vmul.f32 %v243, %v803
  %v916 = vmul.f32 %v244, %v804
  %v917 = vmul.f32 %v245, %v805
  %v918 = vmul.f32 %v246, %v806
  %v919 = vmul.f32 %v247, %v807
  %v920 = vmul.f32 %v248, %v808
  %v921 = vmul.f32 %v249, %v809
  %v922 = vmul.f32 %v250, %v810
  %v923 = vmul.f32 %v251, %v811
  %v924 = vmul.f32 %v252, %v812
  %v925 = vmul.f32 %v253, %v813
  %v926 = vmul.f32 %v254, %v814
  %v927 = vmul.f32 %v255, %v815
  %v928 = vmul.f32 %v256, %v816
  %v929 = vmul.f32 %v257, %v817
  %v930 = vmul.f32 %v258, %v818
  %v931 = vmul.f32 %v259, %v819
  %v932 = vmul.f32 %v260, %v820
  %v933 = vmul.f32 %v261, %v821
  %v934 = vmul.f32 %v262, %v822
  %v935 = vmul.f32 %v263, %v823
  %v936 = vmul.f32 %v264, %v824
  %v937 = vmul.f32 %v265, %v825
  %v938 = vmul.f32 %v266, %v826
  %v939 = vmul.f32 %v267, %v827
  %v940 = vmul.f32 %v268, %v828
  %v941 = vmul.f32 %v269, %v829
  %v942 = vmul.f32 %v270, %v830
  %v943 = vmul.f32 %v271, %v831
  %v944 = vmul.f32 %v272, %v832
  %v945 = vmul.f32 %v273, %v833
  %v946 = vmul.f32 %v274, %v834
  %v947 = vmul.f32 %v275, %v835
  %v948 = vmul.f32 %v276, %v836
  %v949 = vmul.f32 %v277, %v837
  %v950 = vmul.f32 %v278, %v838
  %v951 = vmul.f32 %v279, %v839
  %v952 = vmul.f32 %v280, %v840
  %v953 = vmul.f32 %v281, %v841
  %v954 = vmul.f32 %v282, %v842
  %v955 = vmul.f32 %v283, %v843
  %v956 = vmul.f32 %v284, %v844
  %v957 = vmul.f32 %v285, %v845
  %v958 = vmul.f32 %v286, %v846
  %v959 = vmul.f32 %v287, %v847
  %v960 = vmul.f32 %v288, %v848
  %v961 = vmul.f32 %v289, %v849
  %v962 = vmul.f32 %v290, %v850
  %v963 = vmul.f32 %v291, %v851
  %v964 = vmul.f32 %v292, %v852
  %v965 = vmul.f32 %v293, %v853
  %v966 = vmul.f32 %v294, %v854
  %v967 = vsub.f32 %v855, %v911
  %v968 = vsub.f32 %v856, %v912
  %v969 = vsub.f32 %v857, %v913
  %v970 = vsub.f32 %v858, %v914
  %v971 = vsub.f32 %v859, %v915
  %v972 = vsub.f32 %v860, %v916
  %v973 = vsub.f32 %v861, %v917
  %v974 = vsub.f32 %v862, %v918
  %v975 = vsub.f32 %v863, %v919
  %v976 = vsub.f32 %v864, %v920
  %v977 = vsub.f32 %v865, %v921
  %v978 = vsub.f32 %v866, %v922
  %v979 = vsub.f32 %v867, %v923
  %v980 = vsub.f32 %v868, %v924
  %v981 = vsub.f32 %v869, %v925
  %v982 = vsub.f32 %v870, %v926
  %v983 = vsub.f32 %v871, %v927
  %v984 = vsub.f32 %v872, %v928
  %v985 = vsub.f32 %v873, %v929
  %v986 = vsub.f32 %v874, %v930
  %v987 = vsub.f32 %v875, %v931
  %v988 = vsub.f32 %v876, %v932
  %v989 = vsub.f32 %v877, %v933
  %v990 = vsub.f32 %v878, %v934
  %v991 = vsub.f32 %v879, %v935
  %v992 = vsub.f32 %v880, %v936
  %v993 = vsub.f32 %v881, %v937
  %v994 = vsub.f32 %v882, %v938
  %v995 = vsub.f32 %v883, %v939
  %v996 = vsub.f32 %v884, %v940
  %v997 = vsub.f32 %v885, %v941
  %v998 = vsub.f32 %v886, %v942
  %v999 = vsub.f32 %v887, %v943
  %v1000 = vsub.f32 %v888, %v944
  %v1001 = vsub.f32 %v889, %v945
  %v1002 = vsub.f32 %v890, %v946
  %v1003 = vsub.f32 %v891, %v947
  %v1004 = vsub.f32 %v892, %v948
  %v1005 = vsub.f32 %v893, %v949
  %v1006 = vsub.f32 %v894, %v950
  %v1007 = vsub.f32 %v895, %v951
  %v1008 = vsub.f32 %v896, %v952
  %v1009 = vsub.f32 %v897, %v953
  %v1010 = vsub.f32 %v898, %v954
  %v1011 = vsub.f32 %v899, %v955
  %v1012 = vsub.f32 %v900, %v956
  %v1013 = vsub.f32 %v901, %v957
  %v1014 = vsub.f32 %v902, %v958
  %v1015 = vsub.f32 %v903, %v959
  %v1016 = vsub.f32 %v904, %v960
  %v1017 = vsub.f32 %v905, %v961
  %v1018 = vsub.f32 %v906, %v962
  %v1019 = vsub.f32 %v907, %v963
  %v1020 = vsub.f32 %v908, %v964
  %v1021 = vsub.f32 %v909, %v965
  %v1022 = vsub.f32 %v910, %v966
  %1024 = vset.pattern.permute.xlu0 0
  %1025 = vperm.xlu0 %1024, %v799
  %v1026 = vpop.permute.xlu0 %1025
  %1029 = vset.pattern.permute.xlu0 0
  %1030 = vperm.xlu0 %1029, %v800
  %v1031 = vpop.permute.xlu0 %1030
  %1034 = vset.pattern.permute.xlu0 0
  %1035 = vperm.xlu0 %1034, %v801
  %v1036 = vpop.permute.xlu0 %1035
  %1039 = vset.pattern.permute.xlu0 0
  %1040 = vperm.xlu0 %1039, %v802
  %v1041 = vpop.permute.xlu0 %1040
  %1044 = vset.pattern.permute.xlu0 0
  %1045 = vperm.xlu0 %1044, %v803
  %v1046 = vpop.permute.xlu0 %1045
  %1049 = vset.pattern.permute.xlu0 0
  %1050 = vperm.xlu0 %1049, %v804
  %v1051 = vpop.permute.xlu0 %1050
  %1054 = vset.pattern.permute.xlu0 0
  %1055 = vperm.xlu0 %1054, %v805
  %v1056 = vpop.permute.xlu0 %1055
  %1059 = vset.pattern.permute.xlu0 0
  %1060 = vperm.xlu0 %1059, %v806
  %v1061 = vpop.permute.xlu0 %1060
  %1064 = vset.pattern.permute.xlu0 0
  %1065 = vperm.xlu0 %1064, %v807
  %v1066 = vpop.permute.xlu0 %1065
  %1069 = vset.pattern.permute.xlu0 0
  %1070 = vperm.xlu0 %1069, %v808
  %v1071 = vpop.permute.xlu0 %1070
  %1074 = vset.pattern.permute.xlu0 0
  %1075 = vperm.xlu0 %1074, %v809
  %v1076 = vpop.permute.xlu0 %1075
  %1079 = vset.pattern.permute.xlu0 0
  %1080 = vperm.xlu0 %1079, %v810
  %v1081 = vpop.permute.xlu0 %1080
  %1084 = vset.pattern.permute.xlu0 0
  %1085 = vperm.xlu0 %1084, %v811
  %v1086 = vpop.permute.xlu0 %1085
  %1089 = vset.pattern.permute.xlu0 0
  %1090 = vperm.xlu0 %1089, %v812
  %v1091 = vpop.permute.xlu0 %1090
  %1094 = vset.pattern.permute.xlu0 0
  %1095 = vperm.xlu0 %1094, %v813
  %v1096 = vpop.permute.xlu0 %1095
  %1099 = vset.pattern.permute.xlu0 0
  %1100 = vperm.xlu0 %1099, %v814
  %v1101 = vpop.permute.xlu0 %1100
  %1104 = vset.pattern.permute.xlu0 0
  %1105 = vperm.xlu0 %1104, %v815
  %v1106 = vpop.permute.xlu0 %1105
  %1109 = vset.pattern.permute.xlu0 0
  %1110 = vperm.xlu0 %1109, %v816
  %v1111 = vpop.permute.xlu0 %1110
  %1114 = vset.pattern.permute.xlu0 0
  %1115 = vperm.xlu0 %1114, %v817
  %v1116 = vpop.permute.xlu0 %1115
  %1119 = vset.pattern.permute.xlu0 0
  %1120 = vperm.xlu0 %1119, %v818
  %v1121 = vpop.permute.xlu0 %1120
  %1124 = vset.pattern.permute.xlu0 0
  %1125 = vperm.xlu0 %1124, %v819
  %v1126 = vpop.permute.xlu0 %1125
  %1129 = vset.pattern.permute.xlu0 0
  %1130 = vperm.xlu0 %1129, %v820
  %v1131 = vpop.permute.xlu0 %1130
  %1134 = vset.pattern.permute.xlu0 0
  %1135 = vperm.xlu0 %1134, %v821
  %v1136 = vpop.permute.xlu0 %1135
  %1139 = vset.pattern.permute.xlu0 0
  %1140 = vperm.xlu0 %1139, %v822
  %v1141 = vpop.permute.xlu0 %1140
  %1144 = vset.pattern.permute.xlu0 0
  %1145 = vperm.xlu0 %1144, %v823
  %v1146 = vpop.permute.xlu0 %1145
  %1149 = vset.pattern.permute.xlu0 0
  %1150 = vperm.xlu0 %1149, %v824
  %v1151 = vpop.permute.xlu0 %1150
  %1154 = vset.pattern.permute.xlu0 0
  %1155 = vperm.xlu0 %1154, %v825
  %v1156 = vpop.permute.xlu0 %1155
  %1159 = vset.pattern.permute.xlu0 0
  %1160 = vperm.xlu0 %1159, %v826
  %v1161 = vpop.permute.xlu0 %1160
  %1164 = vset.pattern.permute.xlu0 0
  %1165 = vperm.xlu0 %1164, %v827
  %v1166 = vpop.permute.xlu0 %1165
  %1169 = vset.pattern.permute.xlu0 0
  %1170 = vperm.xlu0 %1169, %v828
  %v1171 = vpop.permute.xlu0 %1170
  %1174 = vset.pattern.permute.xlu0 0
  %1175 = vperm.xlu0 %1174, %v829
  %v1176 = vpop.permute.xlu0 %1175
  %1179 = vset.pattern.permute.xlu0 0
  %1180 = vperm.xlu0 %1179, %v830
  %v1181 = vpop.permute.xlu0 %1180
  %1184 = vset.pattern.permute.xlu0 0
  %1185 = vperm.xlu0 %1184, %v831
  %v1186 = vpop.permute.xlu0 %1185
  %1189 = vset.pattern.permute.xlu0 0
  %1190 = vperm.xlu0 %1189, %v832
  %v1191 = vpop.permute.xlu0 %1190
  %1194 = vset.pattern.permute.xlu0 0
  %1195 = vperm.xlu0 %1194, %v833
  %v1196 = vpop.permute.xlu0 %1195
  %1199 = vset.pattern.permute.xlu0 0
  %1200 = vperm.xlu0 %1199, %v834
  %v1201 = vpop.permute.xlu0 %1200
  %1204 = vset.pattern.permute.xlu0 0
  %1205 = vperm.xlu0 %1204, %v835
  %v1206 = vpop.permute.xlu0 %1205
  %1209 = vset.pattern.permute.xlu0 0
  %1210 = vperm.xlu0 %1209, %v836
  %v1211 = vpop.permute.xlu0 %1210
  %1214 = vset.pattern.permute.xlu0 0
  %1215 = vperm.xlu0 %1214, %v837
  %v1216 = vpop.permute.xlu0 %1215
  %1219 = vset.pattern.permute.xlu0 0
  %1220 = vperm.xlu0 %1219, %v838
  %v1221 = vpop.permute.xlu0 %1220
  %1224 = vset.pattern.permute.xlu0 0
  %1225 = vperm.xlu0 %1224, %v839
  %v1226 = vpop.permute.xlu0 %1225
  %1229 = vset.pattern.permute.xlu0 0
  %1230 = vperm.xlu0 %1229, %v840
  %v1231 = vpop.permute.xlu0 %1230
  %1234 = vset.pattern.permute.xlu0 0
  %1235 = vperm.xlu0 %1234, %v841
  %v1236 = vpop.permute.xlu0 %1235
  %1239 = vset.pattern.permute.xlu0 0
  %1240 = vperm.xlu0 %1239, %v842
  %v1241 = vpop.permute.xlu0 %1240
  %1244 = vset.pattern.permute.xlu0 0
  %1245 = vperm.xlu0 %1244, %v843
  %v1246 = vpop.permute.xlu0 %1245
  %1249 = vset.pattern.permute.xlu0 0
  %1250 = vperm.xlu0 %1249, %v844
  %v1251 = vpop.permute.xlu0 %1250
  %1254 = vset.pattern.permute.xlu0 0
  %1255 = vperm.xlu0 %1254, %v845
  %v1256 = vpop.permute.xlu0 %1255
  %1259 = vset.pattern.permute.xlu0 0
  %1260 = vperm.xlu0 %1259, %v846
  %v1261 = vpop.permute.xlu0 %1260
  %1264 = vset.pattern.permute.xlu0 0
  %1265 = vperm.xlu0 %1264, %v847
  %v1266 = vpop.permute.xlu0 %1265
  %1269 = vset.pattern.permute.xlu0 0
  %1270 = vperm.xlu0 %1269, %v848
  %v1271 = vpop.permute.xlu0 %1270
  %1274 = vset.pattern.permute.xlu0 0
  %1275 = vperm.xlu0 %1274, %v849
  %v1276 = vpop.permute.xlu0 %1275
  %1279 = vset.pattern.permute.xlu0 0
  %1280 = vperm.xlu0 %1279, %v850
  %v1281 = vpop.permute.xlu0 %1280
  %1284 = vset.pattern.permute.xlu0 0
  %1285 = vperm.xlu0 %1284, %v851
  %v1286 = vpop.permute.xlu0 %1285
  %1289 = vset.pattern.permute.xlu0 0
  %1290 = vperm.xlu0 %1289, %v852
  %v1291 = vpop.permute.xlu0 %1290
  %1294 = vset.pattern.permute.xlu0 0
  %1295 = vperm.xlu0 %1294, %v853
  %v1296 = vpop.permute.xlu0 %1295
  %1299 = vset.pattern.permute.xlu0 0
  %1300 = vperm.xlu0 %1299, %v854
  %v1301 = vpop.permute.xlu0 %1300
  %v1303 = vmul.f32 %v14, %v1026
  %v1304 = vmul.f32 %v15, %v1031
  %v1305 = vmul.f32 %v16, %v1036
  %v1306 = vmul.f32 %v17, %v1041
  %v1307 = vmul.f32 %v18, %v1046
  %v1308 = vmul.f32 %v19, %v1051
  %v1309 = vmul.f32 %v20, %v1056
  %v1310 = vmul.f32 %v21, %v1061
  %v1311 = vmul.f32 %v22, %v1066
  %v1312 = vmul.f32 %v23, %v1071
  %v1313 = vmul.f32 %v24, %v1076
  %v1314 = vmul.f32 %v25, %v1081
  %v1315 = vmul.f32 %v26, %v1086
  %v1316 = vmul.f32 %v27, %v1091
  %v1317 = vmul.f32 %v28, %v1096
  %v1318 = vmul.f32 %v29, %v1101
  %v1319 = vmul.f32 %v30, %v1106
  %v1320 = vmul.f32 %v31, %v1111
  %v1321 = vmul.f32 %v32, %v1116
  %v1322 = vmul.f32 %v33, %v1121
  %v1323 = vmul.f32 %v34, %v1126
  %v1324 = vmul.f32 %v35, %v1131
  %v1325 = vmul.f32 %v36, %v1136
  %v1326 = vmul.f32 %v37, %v1141
  %v1327 = vmul.f32 %v38, %v1146
  %v1328 = vmul.f32 %v39, %v1151
  %v1329 = vmul.f32 %v40, %v1156
  %v1330 = vmul.f32 %v41, %v1161
  %v1331 = vmul.f32 %v42, %v1166
  %v1332 = vmul.f32 %v43, %v1171
  %v1333 = vmul.f32 %v44, %v1176
  %v1334 = vmul.f32 %v45, %v1181
  %v1335 = vmul.f32 %v46, %v1186
  %v1336 = vmul.f32 %v47, %v1191
  %v1337 = vmul.f32 %v48, %v1196
  %v1338 = vmul.f32 %v49, %v1201
  %v1339 = vmul.f32 %v50, %v1206
  %v1340 = vmul.f32 %v51, %v1211
  %v1341 = vmul.f32 %v52, %v1216
  %v1342 = vmul.f32 %v53, %v1221
  %v1343 = vmul.f32 %v54, %v1226
  %v1344 = vmul.f32 %v55, %v1231
  %v1345 = vmul.f32 %v56, %v1236
  %v1346 = vmul.f32 %v57, %v1241
  %v1347 = vmul.f32 %v58, %v1246
  %v1348 = vmul.f32 %v59, %v1251
  %v1349 = vmul.f32 %v60, %v1256
  %v1350 = vmul.f32 %v61, %v1261
  %v1351 = vmul.f32 %v62, %v1266
  %v1352 = vmul.f32 %v63, %v1271
  %v1353 = vmul.f32 %v64, %v1276
  %v1354 = vmul.f32 %v65, %v1281
  %v1355 = vmul.f32 %v66, %v1286
  %v1356 = vmul.f32 %v67, %v1291
  %v1357 = vmul.f32 %v68, %v1296
  %v1358 = vmul.f32 %v69, %v1301
  %1360 = vset.pattern.permute.xlu0 0
  %1361 = vperm.xlu0 %1360, %v967
  %v1362 = vpop.permute.xlu0 %1361
  %1365 = vset.pattern.permute.xlu0 0
  %1366 = vperm.xlu0 %1365, %v968
  %v1367 = vpop.permute.xlu0 %1366
  %1370 = vset.pattern.permute.xlu0 0
  %1371 = vperm.xlu0 %1370, %v969
  %v1372 = vpop.permute.xlu0 %1371
  %1375 = vset.pattern.permute.xlu0 0
  %1376 = vperm.xlu0 %1375, %v970
  %v1377 = vpop.permute.xlu0 %1376
  %1380 = vset.pattern.permute.xlu0 0
  %1381 = vperm.xlu0 %1380, %v971
  %v1382 = vpop.permute.xlu0 %1381
  %1385 = vset.pattern.permute.xlu0 0
  %1386 = vperm.xlu0 %1385, %v972
  %v1387 = vpop.permute.xlu0 %1386
  %1390 = vset.pattern.permute.xlu0 0
  %1391 = vperm.xlu0 %1390, %v973
  %v1392 = vpop.permute.xlu0 %1391
  %1395 = vset.pattern.permute.xlu0 0
  %1396 = vperm.xlu0 %1395, %v974
  %v1397 = vpop.permute.xlu0 %1396
  %1400 = vset.pattern.permute.xlu0 0
  %1401 = vperm.xlu0 %1400, %v975
  %v1402 = vpop.permute.xlu0 %1401
  %1405 = vset.pattern.permute.xlu0 0
  %1406 = vperm.xlu0 %1405, %v976
  %v1407 = vpop.permute.xlu0 %1406
  %1410 = vset.pattern.permute.xlu0 0
  %1411 = vperm.xlu0 %1410, %v977
  %v1412 = vpop.permute.xlu0 %1411
  %1415 = vset.pattern.permute.xlu0 0
  %1416 = vperm.xlu0 %1415, %v978
  %v1417 = vpop.permute.xlu0 %1416
  %1420 = vset.pattern.permute.xlu0 0
  %1421 = vperm.xlu0 %1420, %v979
  %v1422 = vpop.permute.xlu0 %1421
  %1425 = vset.pattern.permute.xlu0 0
  %1426 = vperm.xlu0 %1425, %v980
  %v1427 = vpop.permute.xlu0 %1426
  %1430 = vset.pattern.permute.xlu0 0
  %1431 = vperm.xlu0 %1430, %v981
  %v1432 = vpop.permute.xlu0 %1431
  %1435 = vset.pattern.permute.xlu0 0
  %1436 = vperm.xlu0 %1435, %v982
  %v1437 = vpop.permute.xlu0 %1436
  %1440 = vset.pattern.permute.xlu0 0
  %1441 = vperm.xlu0 %1440, %v983
  %v1442 = vpop.permute.xlu0 %1441
  %1445 = vset.pattern.permute.xlu0 0
  %1446 = vperm.xlu0 %1445, %v984
  %v1447 = vpop.permute.xlu0 %1446
  %1450 = vset.pattern.permute.xlu0 0
  %1451 = vperm.xlu0 %1450, %v985
  %v1452 = vpop.permute.xlu0 %1451
  %1455 = vset.pattern.permute.xlu0 0
  %1456 = vperm.xlu0 %1455, %v986
  %v1457 = vpop.permute.xlu0 %1456
  %1460 = vset.pattern.permute.xlu0 0
  %1461 = vperm.xlu0 %1460, %v987
  %v1462 = vpop.permute.xlu0 %1461
  %1465 = vset.pattern.permute.xlu0 0
  %1466 = vperm.xlu0 %1465, %v988
  %v1467 = vpop.permute.xlu0 %1466
  %1470 = vset.pattern.permute.xlu0 0
  %1471 = vperm.xlu0 %1470, %v989
  %v1472 = vpop.permute.xlu0 %1471
  %1475 = vset.pattern.permute.xlu0 0
  %1476 = vperm.xlu0 %1475, %v990
  %v1477 = vpop.permute.xlu0 %1476
  %1480 = vset.pattern.permute.xlu0 0
  %1481 = vperm.xlu0 %1480, %v991
  %v1482 = vpop.permute.xlu0 %1481
  %1485 = vset.pattern.permute.xlu0 0
  %1486 = vperm.xlu0 %1485, %v992
  %v1487 = vpop.permute.xlu0 %1486
  %1490 = vset.pattern.permute.xlu0 0
  %1491 = vperm.xlu0 %1490, %v993
  %v1492 = vpop.permute.xlu0 %1491
  %1495 = vset.pattern.permute.xlu0 0
  %1496 = vperm.xlu0 %1495, %v994
  %v1497 = vpop.permute.xlu0 %1496
  %1500 = vset.pattern.permute.xlu0 0
  %1501 = vperm.xlu0 %1500, %v995
  %v1502 = vpop.permute.xlu0 %1501
  %1505 = vset.pattern.permute.xlu0 0
  %1506 = vperm.xlu0 %1505, %v996
  %v1507 = vpop.permute.xlu0 %1506
  %1510 = vset.pattern.permute.xlu0 0
  %1511 = vperm.xlu0 %1510, %v997
  %v1512 = vpop.permute.xlu0 %1511
  %1515 = vset.pattern.permute.xlu0 0
  %1516 = vperm.xlu0 %1515, %v998
  %v1517 = vpop.permute.xlu0 %1516
  %1520 = vset.pattern.permute.xlu0 0
  %1521 = vperm.xlu0 %1520, %v999
  %v1522 = vpop.permute.xlu0 %1521
  %1525 = vset.pattern.permute.xlu0 0
  %1526 = vperm.xlu0 %1525, %v1000
  %v1527 = vpop.permute.xlu0 %1526
  %1530 = vset.pattern.permute.xlu0 0
  %1531 = vperm.xlu0 %1530, %v1001
  %v1532 = vpop.permute.xlu0 %1531
  %1535 = vset.pattern.permute.xlu0 0
  %1536 = vperm.xlu0 %1535, %v1002
  %v1537 = vpop.permute.xlu0 %1536
  %1540 = vset.pattern.permute.xlu0 0
  %1541 = vperm.xlu0 %1540, %v1003
  %v1542 = vpop.permute.xlu0 %1541
  %1545 = vset.pattern.permute.xlu0 0
  %1546 = vperm.xlu0 %1545, %v1004
  %v1547 = vpop.permute.xlu0 %1546
  %1550 = vset.pattern.permute.xlu0 0
  %1551 = vperm.xlu0 %1550, %v1005
  %v1552 = vpop.permute.xlu0 %1551
  %1555 = vset.pattern.permute.xlu0 0
  %1556 = vperm.xlu0 %1555, %v1006
  %v1557 = vpop.permute.xlu0 %1556
  %1560 = vset.pattern.permute.xlu0 0
  %1561 = vperm.xlu0 %1560, %v1007
  %v1562 = vpop.permute.xlu0 %1561
  %1565 = vset.pattern.permute.xlu0 0
  %1566 = vperm.xlu0 %1565, %v1008
  %v1567 = vpop.permute.xlu0 %1566
  %1570 = vset.pattern.permute.xlu0 0
  %1571 = vperm.xlu0 %1570, %v1009
  %v1572 = vpop.permute.xlu0 %1571
  %1575 = vset.pattern.permute.xlu0 0
  %1576 = vperm.xlu0 %1575, %v1010
  %v1577 = vpop.permute.xlu0 %1576
  %1580 = vset.pattern.permute.xlu0 0
  %1581 = vperm.xlu0 %1580, %v1011
  %v1582 = vpop.permute.xlu0 %1581
  %1585 = vset.pattern.permute.xlu0 0
  %1586 = vperm.xlu0 %1585, %v1012
  %v1587 = vpop.permute.xlu0 %1586
  %1590 = vset.pattern.permute.xlu0 0
  %1591 = vperm.xlu0 %1590, %v1013
  %v1592 = vpop.permute.xlu0 %1591
  %1595 = vset.pattern.permute.xlu0 0
  %1596 = vperm.xlu0 %1595, %v1014
  %v1597 = vpop.permute.xlu0 %1596
  %1600 = vset.pattern.permute.xlu0 0
  %1601 = vperm.xlu0 %1600, %v1015
  %v1602 = vpop.permute.xlu0 %1601
  %1605 = vset.pattern.permute.xlu0 0
  %1606 = vperm.xlu0 %1605, %v1016
  %v1607 = vpop.permute.xlu0 %1606
  %1610 = vset.pattern.permute.xlu0 0
  %1611 = vperm.xlu0 %1610, %v1017
  %v1612 = vpop.permute.xlu0 %1611
  %1615 = vset.pattern.permute.xlu0 0
  %1616 = vperm.xlu0 %1615, %v1018
  %v1617 = vpop.permute.xlu0 %1616
  %1620 = vset.pattern.permute.xlu0 0
  %1621 = vperm.xlu0 %1620, %v1019
  %v1622 = vpop.permute.xlu0 %1621
  %1625 = vset.pattern.permute.xlu0 0
  %1626 = vperm.xlu0 %1625, %v1020
  %v1627 = vpop.permute.xlu0 %1626
  %1630 = vset.pattern.permute.xlu0 0
  %1631 = vperm.xlu0 %1630, %v1021
  %v1632 = vpop.permute.xlu0 %1631
  %1635 = vset.pattern.permute.xlu0 0
  %1636 = vperm.xlu0 %1635, %v1022
  %v1637 = vpop.permute.xlu0 %1636
  %v1639 = vadd.f32 %v1303, %v1362
  %v1640 = vadd.f32 %v1304, %v1367
  %v1641 = vadd.f32 %v1305, %v1372
  %v1642 = vadd.f32 %v1306, %v1377
  %v1643 = vadd.f32 %v1307, %v1382
  %v1644 = vadd.f32 %v1308, %v1387
  %v1645 = vadd.f32 %v1309, %v1392
  %v1646 = vadd.f32 %v1310, %v1397
  %v1647 = vadd.f32 %v1311, %v1402
  %v1648 = vadd.f32 %v1312, %v1407
  %v1649 = vadd.f32 %v1313, %v1412
  %v1650 = vadd.f32 %v1314, %v1417
  %v1651 = vadd.f32 %v1315, %v1422
  %v1652 = vadd.f32 %v1316, %v1427
  %v1653 = vadd.f32 %v1317, %v1432
  %v1654 = vadd.f32 %v1318, %v1437
  %v1655 = vadd.f32 %v1319, %v1442
  %v1656 = vadd.f32 %v1320, %v1447
  %v1657 = vadd.f32 %v1321, %v1452
  %v1658 = vadd.f32 %v1322, %v1457
  %v1659 = vadd.f32 %v1323, %v1462
  %v1660 = vadd.f32 %v1324, %v1467
  %v1661 = vadd.f32 %v1325, %v1472
  %v1662 = vadd.f32 %v1326, %v1477
  %v1663 = vadd.f32 %v1327, %v1482
  %v1664 = vadd.f32 %v1328, %v1487
  %v1665 = vadd.f32 %v1329, %v1492
  %v1666 = vadd.f32 %v1330, %v1497
  %v1667 = vadd.f32 %v1331, %v1502
  %v1668 = vadd.f32 %v1332, %v1507
  %v1669 = vadd.f32 %v1333, %v1512
  %v1670 = vadd.f32 %v1334, %v1517
  %v1671 = vadd.f32 %v1335, %v1522
  %v1672 = vadd.f32 %v1336, %v1527
  %v1673 = vadd.f32 %v1337, %v1532
  %v1674 = vadd.f32 %v1338, %v1537
  %v1675 = vadd.f32 %v1339, %v1542
  %v1676 = vadd.f32 %v1340, %v1547
  %v1677 = vadd.f32 %v1341, %v1552
  %v1678 = vadd.f32 %v1342, %v1557
  %v1679 = vadd.f32 %v1343, %v1562
  %v1680 = vadd.f32 %v1344, %v1567
  %v1681 = vadd.f32 %v1345, %v1572
  %v1682 = vadd.f32 %v1346, %v1577
  %v1683 = vadd.f32 %v1347, %v1582
  %v1684 = vadd.f32 %v1348, %v1587
  %v1685 = vadd.f32 %v1349, %v1592
  %v1686 = vadd.f32 %v1350, %v1597
  %v1687 = vadd.f32 %v1351, %v1602
  %v1688 = vadd.f32 %v1352, %v1607
  %v1689 = vadd.f32 %v1353, %v1612
  %v1690 = vadd.f32 %v1354, %v1617
  %v1691 = vadd.f32 %v1355, %v1622
  %v1692 = vadd.f32 %v1356, %v1627
  %v1693 = vadd.f32 %v1357, %v1632
  %v1694 = vadd.f32 %v1358, %v1637
  %1695 = vst.msk [vmem:[%s3] sm:$0xff] %vm70, %v1639
  %1696 = vst.msk [vmem:[%s3 + $0x8] sm:$0xff] %vm70, %v1640
  %1697 = vst.msk [vmem:[%s3 + $0x10] sm:$0xff] %vm70, %v1641
  %1698 = vst.msk [vmem:[%s3 + $0x18] sm:$0xff] %vm70, %v1642
  %1699 = vst.msk [vmem:[%s3 + $0x20] sm:$0xff] %vm70, %v1643
  %1700 = vst.msk [vmem:[%s3 + $0x28] sm:$0xff] %vm70, %v1644
  %1701 = vst.msk [vmem:[%s3 + $0x30] sm:$0xff] %vm70, %v1645
  %1702 = vst.msk [vmem:[%s3 + $0x38] sm:$0xff] %vm70, %v1646
  %1703 = vst.msk [vmem:[%s3 + $0x40] sm:$0xff] %vm70, %v1647
  %1704 = vst.msk [vmem:[%s3 + $0x48] sm:$0xff] %vm70, %v1648
  %1705 = vst.msk [vmem:[%s3 + $0x50] sm:$0xff] %vm70, %v1649
  %1706 = vst.msk [vmem:[%s3 + $0x58] sm:$0xff] %vm70, %v1650
  %1707 = vst.msk [vmem:[%s3 + $0x60] sm:$0xff] %vm70, %v1651
  %1708 = vst.msk [vmem:[%s3 + $0x68] sm:$0xff] %vm70, %v1652
  %1709 = vst.msk [vmem:[%s3 + $0x70] sm:$0xff] %vm70, %v1653
  %1710 = vst.msk [vmem:[%s3 + $0x78] sm:$0xff] %vm70, %v1654
  %1711 = vst.msk [vmem:[%s3 + $0x80] sm:$0xff] %vm70, %v1655
  %1712 = vst.msk [vmem:[%s3 + $0x88] sm:$0xff] %vm70, %v1656
  %1713 = vst.msk [vmem:[%s3 + $0x90] sm:$0xff] %vm70, %v1657
  %1714 = vst.msk [vmem:[%s3 + $0x98] sm:$0xff] %vm70, %v1658
  %1715 = vst.msk [vmem:[%s3 + $0xa0] sm:$0xff] %vm70, %v1659
  %1716 = vst.msk [vmem:[%s3 + $0xa8] sm:$0xff] %vm70, %v1660
  %1717 = vst.msk [vmem:[%s3 + $0xb0] sm:$0xff] %vm70, %v1661
  %1718 = vst.msk [vmem:[%s3 + $0xb8] sm:$0xff] %vm70, %v1662
  %1719 = vst.msk [vmem:[%s3 + $0xc0] sm:$0xff] %vm70, %v1663
  %1720 = vst.msk [vmem:[%s3 + $0xc8] sm:$0xff] %vm70, %v1664
  %1721 = vst.msk [vmem:[%s3 + $0xd0] sm:$0xff] %vm70, %v1665
  %1722 = vst.msk [vmem:[%s3 + $0xd8] sm:$0xff] %vm70, %v1666
  %1723 = vst.msk [vmem:[%s3 + $0xe0] sm:$0xff] %vm70, %v1667
  %1724 = vst.msk [vmem:[%s3 + $0xe8] sm:$0xff] %vm70, %v1668
  %1725 = vst.msk [vmem:[%s3 + $0xf0] sm:$0xff] %vm70, %v1669
  %1726 = vst.msk [vmem:[%s3 + $0xf8] sm:$0xff] %vm70, %v1670
  %1727 = vst.msk [vmem:[%s3 + $0x100] sm:$0xff] %vm70, %v1671
  %1728 = vst.msk [vmem:[%s3 + $0x108] sm:$0xff] %vm70, %v1672
  %1729 = vst.msk [vmem:[%s3 + $0x110] sm:$0xff] %vm70, %v1673
  %1730 = vst.msk [vmem:[%s3 + $0x118] sm:$0xff] %vm70, %v1674
  %1731 = vst.msk [vmem:[%s3 + $0x120] sm:$0xff] %vm70, %v1675
  %1732 = vst.msk [vmem:[%s3 + $0x128] sm:$0xff] %vm70, %v1676
  %1733 = vst.msk [vmem:[%s3 + $0x130] sm:$0xff] %vm70, %v1677
  %1734 = vst.msk [vmem:[%s3 + $0x138] sm:$0xff] %vm70, %v1678
  %1735 = vst.msk [vmem:[%s3 + $0x140] sm:$0xff] %vm70, %v1679
  %1736 = vst.msk [vmem:[%s3 + $0x148] sm:$0xff] %vm70, %v1680
  %1737 = vst.msk [vmem:[%s3 + $0x150] sm:$0xff] %vm70, %v1681
  %1738 = vst.msk [vmem:[%s3 + $0x158] sm:$0xff] %vm70, %v1682
  %1739 = vst.msk [vmem:[%s3 + $0x160] sm:$0xff] %vm70, %v1683
  %1740 = vst.msk [vmem:[%s3 + $0x168] sm:$0xff] %vm70, %v1684
  %1741 = vst.msk [vmem:[%s3 + $0x170] sm:$0xff] %vm70, %v1685
  %1742 = vst.msk [vmem:[%s3 + $0x178] sm:$0xff] %vm70, %v1686
  %1743 = vst.msk [vmem:[%s3 + $0x180] sm:$0xff] %vm70, %v1687
  %1744 = vst.msk [vmem:[%s3 + $0x188] sm:$0xff] %vm70, %v1688
  %1745 = vst.msk [vmem:[%s3 + $0x190] sm:$0xff] %vm70, %v1689
  %1746 = vst.msk [vmem:[%s3 + $0x198] sm:$0xff] %vm70, %v1690
  %1747 = vst.msk [vmem:[%s3 + $0x1a0] sm:$0xff] %vm70, %v1691
  %1748 = vst.msk [vmem:[%s3 + $0x1a8] sm:$0xff] %vm70, %v1692
  %1749 = vst.msk [vmem:[%s3 + $0x1b0] sm:$0xff] %vm70, %v1693
  %1750 = vst.msk [vmem:[%s3 + $0x1b8] sm:$0xff] %vm70, %v1694
  // Predicated region
  $region14: #{tpu_custom_call.1} parent=0 // pred_check
    _
  $region15: #{tpu_custom_call.1} parent=0 // pred_check_branch
    %1752 = sbr.rel (0) target = $region17
  $region16: #{tpu_custom_call.1} parent=0 // pred_region
    _
  $region17: #{tpu_custom_call.1} parent=0 // pred_fallthru
    _
  // Predicated region
  $region18: #{tpu_custom_call.1} parent=0 // pred_check
    _
  $region19: #{tpu_custom_call.1} parent=0 // pred_check_branch
    %1754 = sbr.rel (0) target = $region21
  $region20: #{tpu_custom_call.1} parent=0 // pred_region
    _
  $region21: #{tpu_custom_call.1} parent=0 // pred_fallthru
    _

</llo_original>
